<compile_context>
chip_gen: v5e
topology: v5e:2x2
jax: 0.10.0
libtpu: 0.0.40
codegen_flags: <defaults>
</compile_context>

<pallas_src>
import jax
import jax.numpy as jnp
import numpy as np
from jax.experimental import pallas as pl
from jax.experimental.pallas import tpu as pltpu

_LANE = 128     # vreg lane width
_SUB_I8 = 32    # int8 sublane packing -> safe row-tile granularity


# ----------------------------- Pallas kernel -------------------------------
def marketing_gnn_kernel(
    a_ref,        # (TM, TK)  int8 : edge counts [counts_rev | counts_self], K-chunk
    xsrc_ref,     # (TK, Wsrc) bf16: banded src feats (dem in 0:32, prod in 32:64)
    scale_ref,    # (TM, Wsrc) f32 : per-row, per-relation 1/deg bands
    root_ref,     # (TM, 32)  bf16 : x_dst (product) features
    w_agg_ref,    # (Wsrc, 64) bf16: fused 0.5*[Wl_rev ; Wl_self].T
    w_root_ref,   # (32, 64)  bf16 : fused 0.5*(Wr_rev + Wr_self [+ Wl_self]).T
    b_hid_ref,    # (1, 64)   f32  : 0.5*(b_rev + b_self)
    w_head_ref,   # (64, 128) bf16 : head weight, zero-padded lanes
    b_head_ref,   # (1, 128)  f32  : head bias, zero-padded lanes
    o_ref,        # (TM, 128) bf16 : lane-dense output tile
    acc_ref,      # (TM, Wsrc) f32 : K-reduction accumulator (VMEM scratch)
):
    k = pl.program_id(1)

    @pl.when(k == 0)
    def _():
        acc_ref[...] = jnp.zeros_like(acc_ref)

    # Streamed aggregation matmul over int8 edge counts: cast to bf16 on the VPU
    # (exact for small multiplicities), one MXU pass, f32 accumulation across K.
    acc_ref[...] += jnp.dot(a_ref[...].astype(jnp.bfloat16), xsrc_ref[...],
                            preferred_element_type=jnp.float32)

    @pl.when(k == pl.num_programs(1) - 1)
    def _():
        # Exact mean aggregation: per-row 1/deg applied in f32 after the matmul.
        agg = (acc_ref[...] * scale_ref[...]).astype(jnp.bfloat16)
        # Fused SAGE lin_l / lin_r + HeteroConv 0.5-mean + biases: two small
        # bf16 matmuls (f32 accumulation) instead of one K=128 padded matmul.
        h = (jnp.dot(agg, w_agg_ref[...], preferred_element_type=jnp.float32)
             + jnp.dot(root_ref[...], w_root_ref[...],
                       preferred_element_type=jnp.float32)
             + b_hid_ref[...])
        # leaky_relu, negative_slope = 0.01
        h = jnp.where(h > 0, h, 0.01 * h)
        # Head Linear(64, P), padded to 128 lanes for a lane-dense bf16 store.
        out = (jnp.dot(h.astype(jnp.bfloat16), w_head_ref[...],
                       preferred_element_type=jnp.float32) + b_head_ref[...])
        o_ref[...] = out.astype(o_ref.dtype)


# ------------------------------- glue / wrapper -----------------------------
def _round_up(x, m):
    return ((x + m - 1) // m) * m


def build_graph_operands(edge_index_dict, n_prod, n_dem, feat=32,
                         row_tile=None, col_tile=None):
    """Everything that depends only on graph structure: build ONCE and reuse
    across forward calls (int8 edge-count operator, 1/deg scales, tiling)."""
    rev_key = ("demographic", "rev_targets", "product")
    self_key = ("product", "self", "product")
    # HeteroConv(aggr='mean') divides by the number of relations that produced an
    # output; the folded 0.5 factor below assumes both product-targeting relations
    # are present.
    assert rev_key in edge_index_dict and self_key in edge_index_dict

    ei_rev = np.asarray(edge_index_dict[rev_key])
    ei_self = np.asarray(edge_index_dict[self_key])
    src_r, dst_r = ei_rev[0], ei_rev[1]
    src_s, dst_s = ei_self[0], ei_self[1]

    # Identity 'self' relation => mean aggregation over self edges is x_prod
    # itself, so that half of the count stream is dropped and Wl_self folds
    # into the root weight (halves the dominant HBM stream when Np >= Nd).
    fold_self = bool(
        ei_self.shape[1] == n_prod
        and np.array_equal(src_s, dst_s)
        and np.array_equal(np.sort(dst_s), np.arange(n_prod)))

    nd_pad = _round_up(max(n_dem, 1), _LANE)
    np_col_pad = _round_up(max(n_prod, 1), _LANE)
    n_src_base = nd_pad if fold_self else nd_pad + np_col_pad
    w_src = feat if fold_self else 2 * feat

    # ---- generation-aware tiling / VMEM budget ------------------------------
    try:
        vmem_cap = int(pltpu.get_tpu_info().vmem_capacity_bytes)
    except Exception:
        vmem_cap = 64 << 20                               # v7x per-core, conservative
    vmem_limit = min(int(vmem_cap * 0.82), 110 << 20)     # ~52 MiB v7x, ~105 MiB v5e/v6e

    tk = col_tile if col_tile is not None else min(n_src_base, 8192)
    tk = min(_round_up(tk, _LANE), _round_up(n_src_base, _LANE))
    n_src_pad = _round_up(n_src_base, tk)

    # Per-row bytes: int8 A tile (x2 bufs) + in-kernel bf16 cast temp + f32 scale
    # (x2) + bf16 root (x2) + bf16 out (x2) + f32 accumulator.
    per_row = 2 * tk + 2 * tk + 2 * 4 * w_src + 2 * 2 * feat + 2 * 2 * _LANE + 4 * w_src
    fixed = 2 * tk * w_src * 2 + (1 << 20)                # X_src double buffer + weights/slack
    tm_vmem = max(_SUB_I8, (vmem_limit - fixed) // per_row)
    # Keep >= 8 row steps when the graph allows it (v7x: 2 TCs share the parallel axis).
    tm_steps = max(_SUB_I8, _round_up(-(-n_prod // 8), _SUB_I8))
    tm = row_tile if row_tile is not None else min(tm_vmem, 1024, tm_steps)
    tm = max(_SUB_I8, _round_up(int(tm), _SUB_I8))
    np_rows_pad = _round_up(max(n_prod, 1), tm)

    # ---- exact int8 edge-count operator [counts_rev | counts_self] ----------
    counts = jnp.zeros((np_rows_pad, n_src_pad), jnp.int8)
    counts = counts.at[dst_r, src_r].add(jnp.int8(1))
    if not fold_self:
        counts = counts.at[dst_s, nd_pad + src_s].add(jnp.int8(1))

    # Per-row, per-relation 1/deg (f32, applied after the matmul => exact mean).
    deg_rev = jnp.zeros((np_rows_pad,), jnp.float32).at[dst_r].add(1.0)
    scale = jnp.ones((np_rows_pad, w_src), jnp.float32)
    scale = scale.at[:, 0:feat].set((1.0 / jnp.maximum(deg_rev, 1.0))[:, None])
    if not fold_self:
        deg_self = jnp.zeros((np_rows_pad,), jnp.float32).at[dst_s].add(1.0)
        scale = scale.at[:, feat:2 * feat].set(
            (1.0 / jnp.maximum(deg_self, 1.0))[:, None])

    return dict(a_cat=counts, scale=scale, fold_self=fold_self,
                nd_pad=nd_pad, n_src_pad=n_src_pad, np_rows_pad=np_rows_pad,
                w_src=w_src, feat=feat, tm=int(tm), tk=int(tk),
                vmem_limit_bytes=int(vmem_limit))


def marketing_gnn_forward(params, x_dict, graph):
    feat = params["wl_rev"].shape[1]
    hidden = params["wl_rev"].shape[0]
    n_plat = params["w_lin"].shape[0]
    x_prod = jnp.asarray(x_dict["product"], jnp.float32)
    x_dem = jnp.asarray(x_dict["demographic"], jnp.float32)
    n_prod, n_dem = x_prod.shape[0], x_dem.shape[0]

    tm, tk = graph["tm"], graph["tk"]
    nd_pad, n_src_pad = graph["nd_pad"], graph["n_src_pad"]
    np_rows_pad, w_src = graph["np_rows_pad"], graph["w_src"]
    fold = graph["fold_self"]
    p_pad = _LANE

    # Banded source features (bf16): dem in lanes [0:feat]; prod in [feat:2feat]
    # only when the 'self' relation is not a pure identity.
    x_src = jnp.zeros((n_src_pad, w_src), jnp.bfloat16)
    x_src = x_src.at[:n_dem, 0:feat].set(x_dem.astype(jnp.bfloat16))
    if not fold:
        x_src = x_src.at[nd_pad:nd_pad + n_prod, feat:2 * feat].set(
            x_prod.astype(jnp.bfloat16))

    # Root (x_dst) term: narrow (TM, 32) bf16 stream, no 128-lane zero padding.
    root = jnp.zeros((np_rows_pad, feat), jnp.bfloat16)
    root = root.at[:n_prod].set(x_prod.astype(jnp.bfloat16))

    # Fused SAGE weights (HeteroConv 0.5-mean and both lin_l biases folded in).
    w_agg = jnp.zeros((w_src, hidden), jnp.float32)
    w_agg = w_agg.at[0:feat].set(0.5 * params["wl_rev"].T)
    if not fold:
        w_agg = w_agg.at[feat:2 * feat].set(0.5 * params["wl_self"].T)
    w_agg = w_agg.astype(jnp.bfloat16)

    w_root = 0.5 * (params["wr_rev"] + params["wr_self"]).T
    if fold:
        w_root = w_root + 0.5 * params["wl_self"].T       # identity-self fold
    w_root = w_root.astype(jnp.bfloat16)
    b_hid = (0.5 * (params["b_rev"] + params["b_self"]))[None, :].astype(jnp.float32)

    # Head, zero-padded to a lane-dense 128-wide output.
    w_head = jnp.zeros((hidden, p_pad), jnp.float32).at[:, :n_plat].set(
        params["w_lin"].T).astype(jnp.bfloat16)
    b_head = jnp.zeros((1, p_pad), jnp.float32).at[:, :n_plat].set(params["b_lin"])

    grid = (np_rows_pad // tm, n_src_pad // tk)
    flops = (2 * np_rows_pad * n_src_pad * w_src
             + 2 * np_rows_pad * hidden * (w_src + feat + p_pad))
    bytes_accessed = (np_rows_pad * n_src_pad                     # int8 counts
                      + n_src_pad * w_src * 2                     # X_src bf16
                      + np_rows_pad * (w_src * 4 + feat * 2 + p_pad * 2)
                      + (w_src + feat + p_pad) * hidden * 2
                      + (hidden + p_pad) * 4)

    out = pl.pallas_call(
        marketing_gnn_kernel,
        out_shape=jax.ShapeDtypeStruct((np_rows_pad, p_pad), jnp.bfloat16),
        grid=grid,
        in_specs=[
            pl.BlockSpec((tm, tk), lambda i, k: (i, k)),          # int8 counts (streamed)
            pl.BlockSpec((tk, w_src), lambda i, k: (k, 0)),       # banded src feats
            pl.BlockSpec((tm, w_src), lambda i, k: (i, 0)),       # per-row 1/deg bands
            pl.BlockSpec((tm, feat), lambda i, k: (i, 0)),        # root (x_dst) feats
            pl.BlockSpec((w_src, hidden), lambda i, k: (0, 0)),   # fused lin_l
            pl.BlockSpec((feat, hidden), lambda i, k: (0, 0)),    # fused lin_r (+fold)
            pl.BlockSpec((1, hidden), lambda i, k: (0, 0)),       # fused bias
            pl.BlockSpec((hidden, p_pad), lambda i, k: (0, 0)),   # head weight
            pl.BlockSpec((1, p_pad), lambda i, k: (0, 0)),        # head bias
        ],
        out_specs=pl.BlockSpec((tm, p_pad), lambda i, k: (i, 0)),
        scratch_shapes=[pltpu.VMEM((tm, w_src), jnp.float32)],    # K accumulator
        compiler_params=pltpu.CompilerParams(
            dimension_semantics=("parallel", "arbitrary"),
            vmem_limit_bytes=graph["vmem_limit_bytes"],
        ),
        cost_estimate=pl.CostEstimate(flops=flops, transcendentals=0,
                                      bytes_accessed=bytes_accessed),
    )(graph["a_cat"], x_src, graph["scale"], root,
      w_agg, w_root, b_hid, w_head, b_head)

    return out[:n_prod, :n_plat].astype(jnp.float32)


# Pure-JAX reference mirroring the PyTorch/PyG semantics (for verification).
def mean_aggregation_matrix(edge_index, n_src, n_dst):
    src, dst = edge_index[0], edge_index[1]
    counts = jnp.zeros((n_dst, n_src), jnp.float32).at[dst, src].add(1.0)
    deg = jnp.zeros((n_dst,), jnp.float32).at[dst].add(1.0)
    return counts / jnp.maximum(deg, 1.0)[:, None]


def reference_forward(params, x_dict, edge_index_dict):
    x_prod = jnp.asarray(x_dict["product"], jnp.float32)
    x_dem = jnp.asarray(x_dict["demographic"], jnp.float32)
    n_prod, n_dem = x_prod.shape[0], x_dem.shape[0]
    a_rev = mean_aggregation_matrix(
        edge_index_dict[("demographic", "rev_targets", "product")], n_dem, n_prod)
    a_self = mean_aggregation_matrix(
        edge_index_dict[("product", "self", "product")], n_prod, n_prod)
    h_rev = (a_rev @ x_dem) @ params["wl_rev"].T + params["b_rev"] + x_prod @ params["wr_rev"].T
    h_self = (a_self @ x_prod) @ params["wl_self"].T + params["b_self"] + x_prod @ params["wr_self"].T
    h = 0.5 * (h_rev + h_self)
    h = jnp.where(h > 0, h, 0.01 * h)
    return h @ params["w_lin"].T + params["b_lin"]


if __name__ == "__main__":
    key = jax.random.PRNGKey(0)
    keys = jax.random.split(key, 16)

    num_platforms = 4
    n_prod, n_dem, feat, hidden = 64, 48, 32, 64

    # Deterministic synthetic parameters (shapes from the module __init__).
    params = {
        "wl_rev": 0.1 * jax.random.normal(keys[0], (hidden, feat), jnp.float32),
        "wr_rev": 0.1 * jax.random.normal(keys[1], (hidden, feat), jnp.float32),
        "b_rev": 0.1 * jax.random.normal(keys[2], (hidden,), jnp.float32),
        "wl_self": 0.1 * jax.random.normal(keys[3], (hidden, feat), jnp.float32),
        "wr_self": 0.1 * jax.random.normal(keys[4], (hidden, feat), jnp.float32),
        "b_self": 0.1 * jax.random.normal(keys[5], (hidden,), jnp.float32),
        "w_lin": 0.1 * jax.random.normal(keys[6], (num_platforms, hidden), jnp.float32),
        "b_lin": 0.1 * jax.random.normal(keys[7], (num_platforms,), jnp.float32),
    }

    x_dict = {
        "product": jax.random.normal(keys[8], (n_prod, feat), jnp.float32),
        "demographic": jax.random.normal(keys[9], (n_dem, feat), jnp.float32),
    }

    n_edges = 96
    rev_edges = jnp.stack([
        jax.random.randint(keys[10], (n_edges,), 0, n_dem),    # sources (dem)
        jax.random.randint(keys[11], (n_edges,), 0, n_prod),   # dests   (prod)
    ])

    # ---- Case 1: identity 'self' relation (folded path, 1 K chunk) ----------
    ei_identity = {
        ("demographic", "rev_targets", "product"): rev_edges,
        ("product", "self", "product"): jnp.stack(
            [jnp.arange(n_prod, dtype=jnp.int32), jnp.arange(n_prod, dtype=jnp.int32)]),
    }
    graph1 = build_graph_operands(ei_identity, n_prod, n_dem, feat=feat)
    assert graph1["fold_self"]
    out1 = jax.block_until_ready(marketing_gnn_forward(params, x_dict, graph1))
    assert out1.shape == (n_prod, num_platforms)
    ref1 = reference_forward(params, x_dict, ei_identity)
    assert jnp.allclose(out1, ref1, atol=4e-2, rtol=4e-2)

    # ---- Case 2: general 'self' relation (two bands, 2 K chunks, 2 row steps)
    self_src = jnp.concatenate([jnp.arange(n_prod, dtype=jnp.int32),
                                jax.random.randint(keys[12], (16,), 0, n_prod)])
    self_dst = jnp.concatenate([(jnp.arange(n_prod, dtype=jnp.int32) + 1) % n_prod,
                                jax.random.randint(keys[13], (16,), 0, n_prod)])
    ei_general = {
        ("demographic", "rev_targets", "product"): rev_edges,
        ("product", "self", "product"): jnp.stack([self_src, self_dst]),
    }
    graph2 = build_graph_operands(ei_general, n_prod, n_dem, feat=feat, col_tile=128)
    assert not graph2["fold_self"]
    out2 = jax.block_until_ready(marketing_gnn_forward(params, x_dict, graph2))
    assert out2.shape == (n_prod, num_platforms)
    ref2 = reference_forward(params, x_dict, ei_general)
    assert jnp.allclose(out2, ref2, atol=4e-2, rtol=4e-2)

    print("KERNEL_OK")
</pallas_src>

<mosaic_0001>
module attributes {stable_mosaic.version = 11 : i64} {
  func.func @marketing_gnn_kernel(%arg0: i32, %arg1: i32, %arg2: memref<32x128xi8, #tpu.memory_space<vmem>>, %arg3: memref<128x32xbf16, #tpu.memory_space<vmem>>, %arg4: memref<32x32xf32, #tpu.memory_space<vmem>>, %arg5: memref<32x32xbf16, #tpu.memory_space<vmem>>, %arg6: memref<32x64xbf16, #tpu.memory_space<vmem>>, %arg7: memref<32x64xbf16, #tpu.memory_space<vmem>>, %arg8: memref<1x64xf32, #tpu.memory_space<vmem>>, %arg9: memref<64x128xbf16, #tpu.memory_space<vmem>>, %arg10: memref<1x128xf32, #tpu.memory_space<vmem>>, %arg11: memref<32x128xbf16, #tpu.memory_space<vmem>>, %arg12: memref<32x32xf32, #tpu.memory_space<vmem>>) attributes {dimension_semantics = [#tpu.dimension_semantics<parallel>, #tpu.dimension_semantics<arbitrary>], iteration_bounds = array<i64: 2, 1>, scalar_prefetch = 0 : i64, scratch_operands = 1 : i64, tpu.core_type = #tpu.core_type<tc>, window_params = [{transform_indices = @transform_0, window_bounds = array<i64: 32, 128>}, {transform_indices = @transform_1, window_bounds = array<i64: 128, 32>}, {transform_indices = @transform_2, window_bounds = array<i64: 32, 32>}, {transform_indices = @transform_3, window_bounds = array<i64: 32, 32>}, {pipeline_mode = #tpu.pipeline_mode<synchronous>, transform_indices = @transform_4, window_bounds = array<i64: 32, 64>}, {pipeline_mode = #tpu.pipeline_mode<synchronous>, transform_indices = @transform_5, window_bounds = array<i64: 32, 64>}, {pipeline_mode = #tpu.pipeline_mode<synchronous>, transform_indices = @transform_6, window_bounds = array<i64: 1, 64>}, {pipeline_mode = #tpu.pipeline_mode<synchronous>, transform_indices = @transform_7, window_bounds = array<i64: 64, 128>}, {pipeline_mode = #tpu.pipeline_mode<synchronous>, transform_indices = @transform_8, window_bounds = array<i64: 1, 128>}, {transform_indices = @transform_9, window_bounds = array<i64: 32, 128>}]} {
    %c0_i32 = arith.constant 0 : i32
    %0 = arith.cmpi eq, %arg1, %c0_i32 : i32
    %1 = arith.extui %0 : i1 to i32
    %c0_i32_0 = arith.constant 0 : i32
    %2 = arith.cmpi ne, %1, %c0_i32_0 : i32
    scf.if %2 {
      %cst_10 = arith.constant 0.000000e+00 : f32
      %13 = vector.broadcast %cst_10 : f32 to vector<32x32xf32>
      %c0_11 = arith.constant 0 : index
      %c0_12 = arith.constant 0 : index
      %14 = vector.load %arg12[%c0_11, %c0_12] : memref<32x32xf32, #tpu.memory_space<vmem>>, vector<32x32xf32>
      tpu.vector_store %arg12[%c0_11, %c0_12], %13 {strides = array<i32>} : memref<32x32xf32, #tpu.memory_space<vmem>>, vector<32x32xf32>,
    } else {
    }
    %c0 = arith.constant 0 : index
    %c0_1 = arith.constant 0 : index
    %3 = vector.load %arg12[%c0, %c0_1] : memref<32x32xf32, #tpu.memory_space<vmem>>, vector<32x32xf32>
    %c0_2 = arith.constant 0 : index
    %c0_3 = arith.constant 0 : index
    %4 = vector.load %arg2[%c0_2, %c0_3] : memref<32x128xi8, #tpu.memory_space<vmem>>, vector<32x128xi8>
    %5 = arith.sitofp %4 : vector<32x128xi8> to vector<32x128xbf16>
    %c0_4 = arith.constant 0 : index
    %c0_5 = arith.constant 0 : index
    %6 = vector.load %arg3[%c0_4, %c0_5] : memref<128x32xbf16, #tpu.memory_space<vmem>>, vector<128x32xbf16>
    %cst = arith.constant dense<0.000000e+00> : vector<32x32xf32>
    %7 = tpu.matmul %5, %6, %cst {dimension_numbers = #tpu.dot_dimension_numbers<[1], [0], [0], [1], [0, 0, 1, 1], [], []>} : vector<32x128xbf16>, vector<128x32xbf16>, vector<32x32xf32> -> vector<32x32xf32>
    %8 = arith.addf %3, %7 : vector<32x32xf32>
    %c0_6 = arith.constant 0 : index
    %c0_7 = arith.constant 0 : index
    %9 = vector.load %arg12[%c0_6, %c0_7] : memref<32x32xf32, #tpu.memory_space<vmem>>, vector<32x32xf32>
    tpu.vector_store %arg12[%c0_6, %c0_7], %8 {strides = array<i32>} : memref<32x32xf32, #tpu.memory_space<vmem>>, vector<32x32xf32>,
    %c0_i32_8 = arith.constant 0 : i32
    %10 = arith.cmpi eq, %arg1, %c0_i32_8 : i32
    %11 = arith.extui %10 : i1 to i32
    %c0_i32_9 = arith.constant 0 : i32
    %12 = arith.cmpi ne, %11, %c0_i32_9 : i32
    scf.if %12 {
      %c0_10 = arith.constant 0 : index
      %c0_11 = arith.constant 0 : index
      %13 = vector.load %arg12[%c0_10, %c0_11] : memref<32x32xf32, #tpu.memory_space<vmem>>, vector<32x32xf32>
      %c0_12 = arith.constant 0 : index
      %c0_13 = arith.constant 0 : index
      %14 = vector.load %arg4[%c0_12, %c0_13] : memref<32x32xf32, #tpu.memory_space<vmem>>, vector<32x32xf32>
      %15 = arith.mulf %13, %14 : vector<32x32xf32>
      %16 = arith.truncf %15 : vector<32x32xf32> to vector<32x32xbf16>
      %c0_14 = arith.constant 0 : index
      %c0_15 = arith.constant 0 : index
      %17 = vector.load %arg6[%c0_14, %c0_15] : memref<32x64xbf16, #tpu.memory_space<vmem>>, vector<32x64xbf16>
      %cst_16 = arith.constant dense<0.000000e+00> : vector<32x64xf32>
      %18 = tpu.matmul %16, %17, %cst_16 {dimension_numbers = #tpu.dot_dimension_numbers<[1], [0], [0], [1], [0, 0, 1, 1], [], []>} : vector<32x32xbf16>, vector<32x64xbf16>, vector<32x64xf32> -> vector<32x64xf32>
      %c0_17 = arith.constant 0 : index
      %c0_18 = arith.constant 0 : index
      %19 = vector.load %arg5[%c0_17, %c0_18] : memref<32x32xbf16, #tpu.memory_space<vmem>>, vector<32x32xbf16>
      %c0_19 = arith.constant 0 : index
      %c0_20 = arith.constant 0 : index
      %20 = vector.load %arg7[%c0_19, %c0_20] : memref<32x64xbf16, #tpu.memory_space<vmem>>, vector<32x64xbf16>
      %cst_21 = arith.constant dense<0.000000e+00> : vector<32x64xf32>
      %21 = tpu.matmul %19, %20, %cst_21 {dimension_numbers = #tpu.dot_dimension_numbers<[1], [0], [0], [1], [0, 0, 1, 1], [], []>} : vector<32x32xbf16>, vector<32x64xbf16>, vector<32x64xf32> -> vector<32x64xf32>
      %22 = arith.addf %18, %21 : vector<32x64xf32>
      %c0_22 = arith.constant 0 : index
      %c0_23 = arith.constant 0 : index
      %23 = vector.load %arg8[%c0_22, %c0_23] : memref<1x64xf32, #tpu.memory_space<vmem>>, vector<1x64xf32>
      %24 = vector.broadcast %23 : vector<1x64xf32> to vector<32x64xf32>
      %25 = arith.addf %22, %24 : vector<32x64xf32>
      %cst_24 = arith.constant 0.000000e+00 : f32
      %26 = vector.broadcast %cst_24 : f32 to vector<32x64xf32>
      %27 = arith.cmpf ogt, %25, %26 : vector<32x64xf32>
      %cst_25 = arith.constant 0.00999999977 : f32
      %28 = vector.broadcast %cst_25 : f32 to vector<32x64xf32>
      %29 = arith.mulf %28, %25 : vector<32x64xf32>
      %30 = arith.select %27, %25, %29 : vector<32x64xi1>, vector<32x64xf32>
      %31 = arith.truncf %30 : vector<32x64xf32> to vector<32x64xbf16>
      %c0_26 = arith.constant 0 : index
      %c0_27 = arith.constant 0 : index
      %32 = vector.load %arg9[%c0_26, %c0_27] : memref<64x128xbf16, #tpu.memory_space<vmem>>, vector<64x128xbf16>
      %cst_28 = arith.constant dense<0.000000e+00> : vector<32x128xf32>
      %33 = tpu.matmul %31, %32, %cst_28 {dimension_numbers = #tpu.dot_dimension_numbers<[1], [0], [0], [1], [0, 0, 1, 1], [], []>} : vector<32x64xbf16>, vector<64x128xbf16>, vector<32x128xf32> -> vector<32x128xf32>
      %c0_29 = arith.constant 0 : index
      %c0_30 = arith.constant 0 : index
      %34 = vector.load %arg10[%c0_29, %c0_30] : memref<1x128xf32, #tpu.memory_space<vmem>>, vector<1x128xf32>
      %35 = vector.broadcast %34 : vector<1x128xf32> to vector<32x128xf32>
      %36 = arith.addf %33, %35 : vector<32x128xf32>
      %37 = arith.truncf %36 : vector<32x128xf32> to vector<32x128xbf16>
      %c0_31 = arith.constant 0 : index
      %c0_32 = arith.constant 0 : index
      %38 = vector.load %arg11[%c0_31, %c0_32] : memref<32x128xbf16, #tpu.memory_space<vmem>>, vector<32x128xbf16>
      tpu.vector_store %arg11[%c0_31, %c0_32], %37 {strides = array<i32>} : memref<32x128xbf16, #tpu.memory_space<vmem>>, vector<32x128xbf16>,
    } else {
    }
    return
  }
  func.func @transform_0(%arg0: i32, %arg1: i32) -> (i32, i32) {
    %c0_i32 = arith.constant 0 : i32
    return %arg0, %arg1 : i32, i32
  }
  func.func @transform_1(%arg0: i32, %arg1: i32) -> (i32, i32) {
    %c0_i32 = arith.constant 0 : i32
    %c0_i32_0 = arith.constant 0 : i32
    return %arg1, %c0_i32 : i32, i32
  }
  func.func @transform_2(%arg0: i32, %arg1: i32) -> (i32, i32) {
    %c0_i32 = arith.constant 0 : i32
    %c0_i32_0 = arith.constant 0 : i32
    return %arg0, %c0_i32 : i32, i32
  }
  func.func @transform_3(%arg0: i32, %arg1: i32) -> (i32, i32) {
    %c0_i32 = arith.constant 0 : i32
    %c0_i32_0 = arith.constant 0 : i32
    return %arg0, %c0_i32 : i32, i32
  }
  func.func @transform_4(%arg0: i32, %arg1: i32) -> (i32, i32) {
    %c0_i32 = arith.constant 0 : i32
    %c0_i32_0 = arith.constant 0 : i32
    %c0_i32_1 = arith.constant 0 : i32
    return %c0_i32, %c0_i32_0 : i32, i32
  }
  func.func @transform_5(%arg0: i32, %arg1: i32) -> (i32, i32) {
    %c0_i32 = arith.constant 0 : i32
    %c0_i32_0 = arith.constant 0 : i32
    %c0_i32_1 = arith.constant 0 : i32
    return %c0_i32, %c0_i32_0 : i32, i32
  }
  func.func @transform_6(%arg0: i32, %arg1: i32) -> (i32, i32) {
    %c0_i32 = arith.constant 0 : i32
    %c0_i32_0 = arith.constant 0 : i32
    %c0_i32_1 = arith.constant 0 : i32
    return %c0_i32, %c0_i32_0 : i32, i32
  }
  func.func @transform_7(%arg0: i32, %arg1: i32) -> (i32, i32) {
    %c0_i32 = arith.constant 0 : i32
    %c0_i32_0 = arith.constant 0 : i32
    %c0_i32_1 = arith.constant 0 : i32
    return %c0_i32, %c0_i32_0 : i32, i32
  }
  func.func @transform_8(%arg0: i32, %arg1: i32) -> (i32, i32) {
    %c0_i32 = arith.constant 0 : i32
    %c0_i32_0 = arith.constant 0 : i32
    %c0_i32_1 = arith.constant 0 : i32
    return %c0_i32, %c0_i32_0 : i32, i32
  }
  func.func @transform_9(%arg0: i32, %arg1: i32) -> (i32, i32) {
    %c0_i32 = arith.constant 0 : i32
    %c0_i32_0 = arith.constant 0 : i32
    return %arg0, %c0_i32 : i32, i32
  }
}

</mosaic_0001>

<llo_original>
// kernel: tpu_custom_call.1
$region0: #{tpu_custom_call.1}
  #allocation0 [shape = 'u32[]', space=smem, size = 0x4, offset = 0x4, fixed_abs, tag = 'smem constant byte address 0x4 - core index']
  #allocation1 [shape = 'u32[72,128]{1,0:T(1,128)}', space=vmem, size = 0x9000, scoped, tag = 'internal scratch']
  #allocation2 [shape = 'f32[32,32]{1,0:T(8,128)}', space=vmem, size = 0x4000, scoped, tag = 'scratch operand']
  %s0 = inlined_call_operand.vmem [shape: s8[64,128], index: 0, kind: input, shape index: {}]
  %s1 = inlined_call_operand.vmem [shape: bf16[128,32], index: 1, kind: input, shape index: {}]
  %s2 = inlined_call_operand.vmem [shape: f32[64,32], index: 2, kind: input, shape index: {}]
  %s3 = inlined_call_operand.vmem [shape: bf16[64,32], index: 3, kind: input, shape index: {}]
  %s4 = inlined_call_operand.vmem [shape: bf16[32,64], index: 4, kind: input, shape index: {}]
  %s5 = inlined_call_operand.vmem [shape: bf16[32,64], index: 5, kind: input, shape index: {}]
  %s6 = inlined_call_operand.vmem [shape: f32[1,64], index: 6, kind: input, shape index: {}]
  %s7 = inlined_call_operand.vmem [shape: bf16[64,128], index: 7, kind: input, shape index: {}]
  %s8 = inlined_call_operand.vmem [shape: f32[1,128], index: 8, kind: input, shape index: {}]
  %s9 = inlined_call_operand.hbm [shape: bf16[64,128], index: 9, kind: output, shape index: {}]
  %s10 = sld [smem:[#allocation0]]
  $region77: #{tpu_custom_call.1} parent=0
    _
  %s12 = ssub.s32 1, %s10
  %s13 = scalar_select 0, %s12, %s10
  $region1: #{tpu_custom_call.1} parent=0
    #allocation3 [shape = 'u8[16384]{0}', space=vmem, size = 0x4000, scoped, tag = 'output window, operand 0']
    #allocation4 [shape = 's32[2]{0}', space=sflag, size = 0x8, scoped, tag = 'scoped memory for tpu_custom_call.1']
    %14 = vsyncpa [#allocation4], 0
    %s15 = scalar_lea.sflag [#allocation4], 1
    %16 = vsyncpa %s15, 0
    loop: start=0, step=1, limit=4
    $region2: #{tpu_custom_call.1} parent=1 // loop_pre_header
      _
    $region3: #{tpu_custom_call.1} parent=1 // loop_header
      %s18 = sphi 0, %s22
      %p19 = scmp.ge.s32.totalorder %s18, 4
      %s25 = sphi 0, %s37
      %s26 = sphi 0, %s33
      %s27 = sphi 0, %s25
      %s28 = sphi 0, %s26
      %s29 = sphi 0, %s27
      %s30 = sphi 0, %s28
      %s42 = sphi 0, %s44
      %s45 = sphi 0, %s42
      %s46 = sphi 0, %s45
      %s62 = sphi 0, %s46
      %s68 = sphi 0, %s70
      %s71 = sphi 0, %s68
      %s72 = sphi 0, %s71
      %s88 = sphi 0, %s72
      %s94 = sphi 0, %s96
      %s97 = sphi 0, %s94
      %s98 = sphi 0, %s97
      %s114 = sphi 0, %s98
      %s120 = sphi 0, %s122
      %s123 = sphi 0, %s120
      %s124 = sphi 0, %s123
      %s140 = sphi 0, %s124
      %s144 = sphi 0, %s144
      %s146 = sphi 0, %s144
      %s147 = sphi 0, %s146
      %s161 = sphi 0, %s147
      %s165 = sphi 0, %s165
      %s167 = sphi 0, %s165
      %s168 = sphi 0, %s167
      %s182 = sphi 0, %s168
      %s186 = sphi 0, %s186
      %s188 = sphi 0, %s186
      %s189 = sphi 0, %s188
      %s203 = sphi 0, %s189
      %s207 = sphi 0, %s207
      %s209 = sphi 0, %s207
      %s210 = sphi 0, %s209
      %s224 = sphi 0, %s210
      %s228 = sphi 0, %s228
      %s230 = sphi 0, %s228
      %s231 = sphi 0, %s230
      %s245 = sphi 0, %s231
      %s251 = sphi 0, %s253
      %s254 = sphi 0, %s251
      %s255 = sphi 0, %s254
      %s271 = sphi 0, %s255
    $region4: #{tpu_custom_call.1} parent=1 // loop_header_branch
      %21 = sbr.rel (%p19) target = $region8
    $region5: #{tpu_custom_call.1} parent=1 // loop_body
      %s23 = ssub.s32 %s18, 1
      %s24 = ssub.s32 %s18, 2
      %s31 = sadd.s32 1, %s26
      %p32 = scmp.ge.s32.totalorder %s31, 1
      %s33 = scalar_select %p32, 0, %s31
      %s34 = sadd.s32 1, %s25
      %s35 = scalar_select %p32, %s34, %s25
      %p36 = scmp.ge.s32.totalorder %s35, 2
      %s37 = scalar_select %p36, 0, %s35
      %s38 = ssub.s32 %s25, %s37
      %s39 = ssub.s32 %s26, %s33
      %s40 = sor.u32 %s38, %s39
      %p41 = scmp.eq.s32.totalorder %s40, 0
      %s43 = sadd.s32 %s42, 1
      %s44 = scalar_select %p41, %s42, %s43
      %p47 = pneg %p41
      %p48 = scmp.eq.s32.totalorder %s18, 1
      %p49 = por %p47, %p48
      %p50 = scmp.ne.s32.totalorder %s42, %s45
      %p51 = scmp.eq.s32.totalorder %s18, 0
      %p52 = por %p50, %p51
      %p53 = scmp.ne.s32.totalorder %s42, %s45
      %p54 = scmp.eq.s32.totalorder %s23, 1
      %p55 = por %p53, %p54
      %p56 = scmp.ne.s32.totalorder %s45, %s46
      %p57 = scmp.eq.s32.totalorder %s23, 0
      %p58 = por %p56, %p57
      %p59 = scmp.ne.s32.totalorder %s45, %s46
      %p60 = scmp.eq.s32.totalorder %s24, 1
      %p61 = por %p59, %p60
      %p63 = scmp.ne.s32.totalorder %s46, %s62
      %p64 = scmp.eq.s32.totalorder %s24, 0
      %p65 = por %p63, %p64
      %s66 = ssub.s32 %s26, %s33
      %p67 = scmp.eq.s32.totalorder %s66, 0
      %s69 = sadd.s32 %s68, 1
      %s70 = scalar_select %p67, %s68, %s69
      %p73 = pneg %p67
      %p74 = scmp.eq.s32.totalorder %s18, 1
      %p75 = por %p73, %p74
      %p76 = scmp.ne.s32.totalorder %s68, %s71
      %p77 = scmp.eq.s32.totalorder %s18, 0
      %p78 = por %p76, %p77
      %p79 = scmp.ne.s32.totalorder %s68, %s71
      %p80 = scmp.eq.s32.totalorder %s23, 1
      %p81 = por %p79, %p80
      %p82 = scmp.ne.s32.totalorder %s71, %s72
      %p83 = scmp.eq.s32.totalorder %s23, 0
      %p84 = por %p82, %p83
      %p85 = scmp.ne.s32.totalorder %s71, %s72
      %p86 = scmp.eq.s32.totalorder %s24, 1
      %p87 = por %p85, %p86
      %p89 = scmp.ne.s32.totalorder %s72, %s88
      %p90 = scmp.eq.s32.totalorder %s24, 0
      %p91 = por %p89, %p90
      %s92 = ssub.s32 %s25, %s37
      %p93 = scmp.eq.s32.totalorder %s92, 0
      %s95 = sadd.s32 %s94, 1
      %s96 = scalar_select %p93, %s94, %s95
      %p99 = pneg %p93
      %p100 = scmp.eq.s32.totalorder %s18, 1
      %p101 = por %p99, %p100
      %p102 = scmp.ne.s32.totalorder %s94, %s97
      %p103 = scmp.eq.s32.totalorder %s18, 0
      %p104 = por %p102, %p103
      %p105 = scmp.ne.s32.totalorder %s94, %s97
      %p106 = scmp.eq.s32.totalorder %s23, 1
      %p107 = por %p105, %p106
      %p108 = scmp.ne.s32.totalorder %s97, %s98
      %p109 = scmp.eq.s32.totalorder %s23, 0
      %p110 = por %p108, %p109
      %p111 = scmp.ne.s32.totalorder %s97, %s98
      %p112 = scmp.eq.s32.totalorder %s24, 1
      %p113 = por %p111, %p112
      %p115 = scmp.ne.s32.totalorder %s98, %s114
      %p116 = scmp.eq.s32.totalorder %s24, 0
      %p117 = por %p115, %p116
      %s118 = ssub.s32 %s25, %s37
      %p119 = scmp.eq.s32.totalorder %s118, 0
      %s121 = sadd.s32 %s120, 1
      %s122 = scalar_select %p119, %s120, %s121
      %p125 = pneg %p119
      %p126 = scmp.eq.s32.totalorder %s18, 1
      %p127 = por %p125, %p126
      %p128 = scmp.ne.s32.totalorder %s120, %s123
      %p129 = scmp.eq.s32.totalorder %s18, 0
      %p130 = por %p128, %p129
      %p131 = scmp.ne.s32.totalorder %s120, %s123
      %p132 = scmp.eq.s32.totalorder %s23, 1
      %p133 = por %p131, %p132
      %p134 = scmp.ne.s32.totalorder %s123, %s124
      %p135 = scmp.eq.s32.totalorder %s23, 0
      %p136 = por %p134, %p135
      %p137 = scmp.ne.s32.totalorder %s123, %s124
      %p138 = scmp.eq.s32.totalorder %s24, 1
      %p139 = por %p137, %p138
      %p141 = scmp.ne.s32.totalorder %s124, %s140
      %p142 = scmp.eq.s32.totalorder %s24, 0
      %p143 = por %p141, %p142
      %s145 = sadd.s32 %s144, 1
      %p148 = scmp.eq.s32.totalorder %s18, 1
      %p149 = scmp.ne.s32.totalorder %s144, %s146
      %p150 = scmp.eq.s32.totalorder %s18, 0
      %p151 = por %p149, %p150
      %p152 = scmp.ne.s32.totalorder %s144, %s146
      %p153 = scmp.eq.s32.totalorder %s23, 1
      %p154 = por %p152, %p153
      %p155 = scmp.ne.s32.totalorder %s146, %s147
      %p156 = scmp.eq.s32.totalorder %s23, 0
      %p157 = por %p155, %p156
      %p158 = scmp.ne.s32.totalorder %s146, %s147
      %p159 = scmp.eq.s32.totalorder %s24, 1
      %p160 = por %p158, %p159
      %p162 = scmp.ne.s32.totalorder %s147, %s161
      %p163 = scmp.eq.s32.totalorder %s24, 0
      %p164 = por %p162, %p163
      %s166 = sadd.s32 %s165, 1
      %p169 = scmp.eq.s32.totalorder %s18, 1
      %p170 = scmp.ne.s32.totalorder %s165, %s167
      %p171 = scmp.eq.s32.totalorder %s18, 0
      %p172 = por %p170, %p171
      %p173 = scmp.ne.s32.totalorder %s165, %s167
      %p174 = scmp.eq.s32.totalorder %s23, 1
      %p175 = por %p173, %p174
      %p176 = scmp.ne.s32.totalorder %s167, %s168
      %p177 = scmp.eq.s32.totalorder %s23, 0
      %p178 = por %p176, %p177
      %p179 = scmp.ne.s32.totalorder %s167, %s168
      %p180 = scmp.eq.s32.totalorder %s24, 1
      %p181 = por %p179, %p180
      %p183 = scmp.ne.s32.totalorder %s168, %s182
      %p184 = scmp.eq.s32.totalorder %s24, 0
      %p185 = por %p183, %p184
      %s187 = sadd.s32 %s186, 1
      %p190 = scmp.eq.s32.totalorder %s18, 1
      %p191 = scmp.ne.s32.totalorder %s186, %s188
      %p192 = scmp.eq.s32.totalorder %s18, 0
      %p193 = por %p191, %p192
      %p194 = scmp.ne.s32.totalorder %s186, %s188
      %p195 = scmp.eq.s32.totalorder %s23, 1
      %p196 = por %p194, %p195
      %p197 = scmp.ne.s32.totalorder %s188, %s189
      %p198 = scmp.eq.s32.totalorder %s23, 0
      %p199 = por %p197, %p198
      %p200 = scmp.ne.s32.totalorder %s188, %s189
      %p201 = scmp.eq.s32.totalorder %s24, 1
      %p202 = por %p200, %p201
      %p204 = scmp.ne.s32.totalorder %s189, %s203
      %p205 = scmp.eq.s32.totalorder %s24, 0
      %p206 = por %p204, %p205
      %s208 = sadd.s32 %s207, 1
      %p211 = scmp.eq.s32.totalorder %s18, 1
      %p212 = scmp.ne.s32.totalorder %s207, %s209
      %p213 = scmp.eq.s32.totalorder %s18, 0
      %p214 = por %p212, %p213
      %p215 = scmp.ne.s32.totalorder %s207, %s209
      %p216 = scmp.eq.s32.totalorder %s23, 1
      %p217 = por %p215, %p216
      %p218 = scmp.ne.s32.totalorder %s209, %s210
      %p219 = scmp.eq.s32.totalorder %s23, 0
      %p220 = por %p218, %p219
      %p221 = scmp.ne.s32.totalorder %s209, %s210
      %p222 = scmp.eq.s32.totalorder %s24, 1
      %p223 = por %p221, %p222
      %p225 = scmp.ne.s32.totalorder %s210, %s224
      %p226 = scmp.eq.s32.totalorder %s24, 0
      %p227 = por %p225, %p226
      %s229 = sadd.s32 %s228, 1
      %p232 = scmp.eq.s32.totalorder %s18, 1
      %p233 = scmp.ne.s32.totalorder %s228, %s230
      %p234 = scmp.eq.s32.totalorder %s18, 0
      %p235 = por %p233, %p234
      %p236 = scmp.ne.s32.totalorder %s228, %s230
      %p237 = scmp.eq.s32.totalorder %s23, 1
      %p238 = por %p236, %p237
      %p239 = scmp.ne.s32.totalorder %s230, %s231
      %p240 = scmp.eq.s32.totalorder %s23, 0
      %p241 = por %p239, %p240
      %p242 = scmp.ne.s32.totalorder %s230, %s231
      %p243 = scmp.eq.s32.totalorder %s24, 1
      %p244 = por %p242, %p243
      %p246 = scmp.ne.s32.totalorder %s231, %s245
      %p247 = scmp.eq.s32.totalorder %s24, 0
      %p248 = por %p246, %p247
      %s249 = ssub.s32 %s25, %s37
      %p250 = scmp.eq.s32.totalorder %s249, 0
      %s252 = sadd.s32 %s251, 1
      %s253 = scalar_select %p250, %s251, %s252
      %p256 = pneg %p250
      %p257 = scmp.eq.s32.totalorder %s18, 1
      %p258 = por %p256, %p257
      %p259 = scmp.ne.s32.totalorder %s251, %s254
      %p260 = scmp.eq.s32.totalorder %s18, 0
      %p261 = por %p259, %p260
      %p262 = scmp.ne.s32.totalorder %s251, %s254
      %p263 = scmp.eq.s32.totalorder %s23, 1
      %p264 = por %p262, %p263
      %p265 = scmp.ne.s32.totalorder %s254, %s255
      %p266 = scmp.eq.s32.totalorder %s23, 0
      %p267 = por %p265, %p266
      %p268 = scmp.ne.s32.totalorder %s254, %s255
      %p269 = scmp.eq.s32.totalorder %s24, 1
      %p270 = por %p268, %p269
      %p272 = scmp.ne.s32.totalorder %s255, %s271
      %p273 = scmp.eq.s32.totalorder %s24, 0
      %p274 = por %p272, %p273
      %p275 = scmp.le.s32.totalorder 1, %s18
      %p276 = scmp.lt.s32.totalorder %s18, 3
      %p277 = pnand %p275, %p276
      %p278 = pneg %p277
      // Predicated region
      $region9: #{tpu_custom_call.1} parent=5 // pred_check
        _
      $region10: #{tpu_custom_call.1} parent=5 // pred_check_branch
        %280 = sbr.rel (%p277) target = $region12
      $region11: #{tpu_custom_call.1} parent=5 // pred_region
        %s281 = ssub.s32 %s18, 1
        // Predicated region
        $region13: #{tpu_custom_call.1} parent=11 // pred_check
          %p282 = pneg %p84
        $region14: #{tpu_custom_call.1} parent=11 // pred_check_branch
          %284 = sbr.rel (%p282) target = $region16
        $region15: #{tpu_custom_call.1} parent=11 // pred_region
          %s285 = smul.u32 16, %s28
          %p286 = scmp.lt.s32.totalorder %s285, 15
          %s287 = scalar_select %p286, %s285, 15
          %s288 = smul.addr %s287, 4
          %s289 = scalar_lea.vmem %s1, %s288
          %s290 = smul.u32 16, %s28
        $region16: #{tpu_custom_call.1} parent=11 // pred_fallthru
          _
        // Predicated region
        $region17: #{tpu_custom_call.1} parent=11 // pred_check
          %p291 = pneg %p157
        $region18: #{tpu_custom_call.1} parent=11 // pred_check_branch
          %293 = sbr.rel (%p291) target = $region20
        $region19: #{tpu_custom_call.1} parent=11 // pred_region
          _
        $region20: #{tpu_custom_call.1} parent=11 // pred_fallthru
          _
        // Predicated region
        $region21: #{tpu_custom_call.1} parent=11 // pred_check
          %p294 = pneg %p178
        $region22: #{tpu_custom_call.1} parent=11 // pred_check_branch
          %296 = sbr.rel (%p294) target = $region24
        $region23: #{tpu_custom_call.1} parent=11 // pred_region
          _
        $region24: #{tpu_custom_call.1} parent=11 // pred_fallthru
          _
        // Predicated region
        $region25: #{tpu_custom_call.1} parent=11 // pred_check
          %p297 = pneg %p199
        $region26: #{tpu_custom_call.1} parent=11 // pred_check_branch
          %299 = sbr.rel (%p297) target = $region28
        $region27: #{tpu_custom_call.1} parent=11 // pred_region
          _
        $region28: #{tpu_custom_call.1} parent=11 // pred_fallthru
          _
        // Predicated region
        $region29: #{tpu_custom_call.1} parent=11 // pred_check
          %p300 = pneg %p220
        $region30: #{tpu_custom_call.1} parent=11 // pred_check_branch
          %302 = sbr.rel (%p300) target = $region32
        $region31: #{tpu_custom_call.1} parent=11 // pred_region
          _
        $region32: #{tpu_custom_call.1} parent=11 // pred_fallthru
          _
        // Predicated region
        $region33: #{tpu_custom_call.1} parent=11 // pred_check
          %p303 = pneg %p241
        $region34: #{tpu_custom_call.1} parent=11 // pred_check_branch
          %305 = sbr.rel (%p303) target = $region36
        $region35: #{tpu_custom_call.1} parent=11 // pred_region
          _
        $region36: #{tpu_custom_call.1} parent=11 // pred_fallthru
          _
      $region12: #{tpu_custom_call.1} parent=5 // pred_fallthru
        _
      %p306 = scmp.lt.s32.totalorder %s18, 2
      // Predicated region
      $region37: #{tpu_custom_call.1} parent=5 // pred_check
        %p307 = pneg %p306
      $region38: #{tpu_custom_call.1} parent=5 // pred_check_branch
        %309 = sbr.rel (%p307) target = $region40
      $region39: #{tpu_custom_call.1} parent=5 // pred_region
        // Predicated region
        $region41: #{tpu_custom_call.1} parent=39 // pred_check
          %p310 = pneg %p52
        $region42: #{tpu_custom_call.1} parent=39 // pred_check_branch
          %312 = sbr.rel (%p310) target = $region44
        $region43: #{tpu_custom_call.1} parent=39 // pred_region
          %p313 = scmp.lt.s32.totalorder %s25, 1
          %s314 = scalar_select %p313, %s25, 1
          %p315 = scmp.lt.s32.totalorder %s26, 0
          %s316 = scalar_select %p315, %s26, 0
          %s317 = sadd.s32 %s316, %s314
          %s318 = smul.addr %s317, 8
          %s319 = scalar_lea.vmem %s0, %s318
        $region44: #{tpu_custom_call.1} parent=39 // pred_fallthru
          _
        // Predicated region
        $region45: #{tpu_custom_call.1} parent=39 // pred_check
          %p320 = pneg %p104
        $region46: #{tpu_custom_call.1} parent=39 // pred_check_branch
          %322 = sbr.rel (%p320) target = $region48
        $region47: #{tpu_custom_call.1} parent=39 // pred_region
          %s323 = smul.u32 4, %s25
          %p324 = scmp.lt.s32.totalorder %s323, 7
          %s325 = scalar_select %p324, %s323, 7
          %s326 = smul.addr %s325, 8
          %s327 = scalar_lea.vmem %s2, %s326
          %s328 = smul.u32 4, %s25
        $region48: #{tpu_custom_call.1} parent=39 // pred_fallthru
          _
        // Predicated region
        $region49: #{tpu_custom_call.1} parent=39 // pred_check
          %p329 = pneg %p130
        $region50: #{tpu_custom_call.1} parent=39 // pred_check_branch
          %331 = sbr.rel (%p329) target = $region52
        $region51: #{tpu_custom_call.1} parent=39 // pred_region
          %s332 = smul.u32 4, %s25
          %p333 = scmp.lt.s32.totalorder %s332, 7
          %s334 = scalar_select %p333, %s332, 7
          %s335 = smul.addr %s334, 4
          %s336 = scalar_lea.vmem %s3, %s335
          %s337 = smul.u32 4, %s25
        $region52: #{tpu_custom_call.1} parent=39 // pred_fallthru
          _
      $region40: #{tpu_custom_call.1} parent=5 // pred_fallthru
        _
      %p338 = scmp.le.s32.totalorder 1, %s18
      %p339 = scmp.lt.s32.totalorder %s18, 3
      %p340 = pnand %p338, %p339
      %p341 = pneg %p340
      // Predicated region
      $region53: #{tpu_custom_call.1} parent=5 // pred_check
        _
      $region54: #{tpu_custom_call.1} parent=5 // pred_check_branch
        %343 = sbr.rel (%p340) target = $region56
      $region55: #{tpu_custom_call.1} parent=5 // pred_region
        %s344 = ssub.s32 %s18, 1
        %p345 = scmp.lt.s32.totalorder %s27, 1
        %s346 = scalar_select %p345, %s27, 1
        %p347 = scmp.lt.s32.totalorder %s28, 0
        %s348 = scalar_select %p347, %s28, 0
        %s349 = sadd.s32 %s348, %s346
        %s350 = smul.addr %s349, 8
        %s351 = scalar_lea.vmem %s0, %s350
        %p352 = pneg %p58
        %p353 = pneg %p55
        %s354 = smul.u32 16, %s28
        %p355 = scmp.lt.s32.totalorder %s354, 15
        %s356 = scalar_select %p355, %s354, 15
        %s357 = smul.addr %s356, 4
        %s358 = scalar_lea.vmem %s1, %s357
        %p359 = pneg %p84
        %p360 = pneg %p81
        %s361 = smul.u32 4, %s27
        %p362 = scmp.lt.s32.totalorder %s361, 7
        %s363 = scalar_select %p362, %s361, 7
        %s364 = smul.addr %s363, 8
        %s365 = scalar_lea.vmem %s2, %s364
        %p366 = pneg %p110
        %p367 = pneg %p107
        %s368 = smul.u32 4, %s27
        %p369 = scmp.lt.s32.totalorder %s368, 7
        %s370 = scalar_select %p369, %s368, 7
        %s371 = smul.addr %s370, 4
        %s372 = scalar_lea.vmem %s3, %s371
        %p373 = pneg %p136
        %p374 = pneg %p133
        %p375 = pneg %p157
        %p376 = pneg %p154
        %p377 = pneg %p178
        %p378 = pneg %p175
        %p379 = pneg %p199
        %p380 = pneg %p196
        %p381 = pneg %p220
        %p382 = pneg %p217
        %p383 = pneg %p241
        %p384 = pneg %p238
        %p385 = pneg %p267
        %p386 = pneg %p264
        %s387 = sand.u32 %s254, 1
        %s388 = scalar_lea.sflag [#allocation4], %s387
        %s389 = sand.u32 %s254, 1
        %s390 = smul.addr %s389, 16
        %s391 = scalar_lea.vmem [#allocation3], %s390
        %p392 = scmp.lt.s32.totalorder %s27, 1
        %s393 = scalar_select %p392, %s27, 1
        %p394 = scmp.lt.s32.totalorder %s28, 0
        %s395 = scalar_select %p394, %s28, 0
        %s396 = sadd.s32 %s395, %s393
        %s397 = smul.addr %s396, 8
        %s398 = scalar_lea.vmem %s0, %s397
        %s399 = smul.u32 16, %s28
        %p400 = scmp.lt.s32.totalorder %s399, 15
        %s401 = scalar_select %p400, %s399, 15
        %s402 = smul.addr %s401, 4
        %s403 = scalar_lea.vmem %s1, %s402
        %s404 = smul.u32 16, %s28
        %s405 = smul.u32 4, %s27
        %p406 = scmp.lt.s32.totalorder %s405, 7
        %s407 = scalar_select %p406, %s405, 7
        %s408 = smul.addr %s407, 8
        %s409 = scalar_lea.vmem %s2, %s408
        %s410 = smul.u32 4, %s27
        %s411 = smul.u32 4, %s27
        %p412 = scmp.lt.s32.totalorder %s411, 7
        %s413 = scalar_select %p412, %s411, 7
        %s414 = smul.addr %s413, 4
        %s415 = scalar_lea.vmem %s3, %s414
        %s416 = smul.u32 4, %s27
        %s417 = smul.u32 4, %s27
        %p419 = scmp.eq.s32.totalorder %s28, 0
        // Predicated region
        $region57: #{tpu_custom_call.1} parent=55 // pred_check
          %p420 = pneg %p419
        $region58: #{tpu_custom_call.1} parent=55 // pred_check_branch
          %422 = sbr.rel (%p420) target = $region60
        $region59: #{tpu_custom_call.1} parent=55 // pred_region
          %vm423 = vcmask 261120
          %424 = vst.msk [vmem:[#allocation2] sm:$0xff] %vm423, 0.0
          %425 = vst.msk [vmem:[#allocation2 + $0x8] sm:$0xff] %vm423, 0.0
          %426 = vst.msk [vmem:[#allocation2 + $0x10] sm:$0xff] %vm423, 0.0
          %427 = vst.msk [vmem:[#allocation2 + $0x18] sm:$0xff] %vm423, 0.0
        $region60: #{tpu_custom_call.1} parent=55 // pred_fallthru
          _
        %v428 = vld [vmem:[#allocation2] sm:$0xff]
        %v429 = vld [vmem:[#allocation2 + $0x8] sm:$0xff]
        %v430 = vld [vmem:[#allocation2 + $0x10] sm:$0xff]
        %v431 = vld [vmem:[#allocation2 + $0x18] sm:$0xff]
        %v432 = vld [vmem:[%s398] sm:$0xff]
        %v433 = vunpack.c.0.s8 %v432
        %v434 = vunpack.c.1.s8 %v432
        %v435 = vunpack.c.2.s8 %v432
        %v436 = vunpack.c.3.s8 %v432
        %v437 = vcvt.s32.f32 %v433
        %v438 = vcvt.s32.f32 %v434
        %v439 = vcvt.s32.f32 %v435
        %v440 = vcvt.s32.f32 %v436
        %v441 = vpack.c.bf16 %v438, %v437
        %v442 = vpack.c.bf16 %v440, %v439
        %v443 = vld [vmem:[%s403] sm:$0xf]
        %v444 = vld [vmem:[%s403 + $0x4] sm:$0xf]
        %v445 = vld [vmem:[%s403 + $0x8] sm:$0xf]
        %v446 = vld [vmem:[%s403 + $0xc] sm:$0xf]
        %v447 = vld [vmem:[%s403 + $0x10] sm:$0xf]
        %v448 = vld [vmem:[%s403 + $0x14] sm:$0xf]
        %v449 = vld [vmem:[%s403 + $0x18] sm:$0xf]
        %v450 = vld [vmem:[%s403 + $0x1c] sm:$0xf]
        %v451 = vld [vmem:[%s403 + $0x20] sm:$0xf]
        %v452 = vld [vmem:[%s403 + $0x24] sm:$0xf]
        %v453 = vld [vmem:[%s403 + $0x28] sm:$0xf]
        %v454 = vld [vmem:[%s403 + $0x2c] sm:$0xf]
        %v455 = vld [vmem:[%s403 + $0x30] sm:$0xf]
        %v456 = vld [vmem:[%s403 + $0x34] sm:$0xf]
        %v457 = vld [vmem:[%s403 + $0x38] sm:$0xf]
        %v458 = vld [vmem:[%s403 + $0x3c] sm:$0xf]
        %v475 = vunpack.c.l.b16 %v443
        %v476 = vunpack.c.l.b16 %v444
        %v477 = vunpack.c.l.b16 %v445
        %v478 = vunpack.c.l.b16 %v446
        %v479 = vunpack.c.l.b16 %v447
        %v480 = vunpack.c.l.b16 %v448
        %v481 = vunpack.c.l.b16 %v449
        %v482 = vunpack.c.l.b16 %v450
        %v483 = vunpack.c.l.b16 %v451
        %v484 = vunpack.c.l.b16 %v452
        %v485 = vunpack.c.l.b16 %v453
        %v486 = vunpack.c.l.b16 %v454
        %v487 = vunpack.c.l.b16 %v455
        %v488 = vunpack.c.l.b16 %v456
        %v489 = vunpack.c.l.b16 %v457
        %v490 = vunpack.c.l.b16 %v458
        %v491 = vpack.c.b16 %v476, %v475
        %v492 = vpack.c.b16 %v478, %v477
        %v493 = vpack.c.b16 %v480, %v479
        %v494 = vpack.c.b16 %v482, %v481
        %v495 = vpack.c.b16 %v484, %v483
        %v496 = vpack.c.b16 %v486, %v485
        %v497 = vpack.c.b16 %v488, %v487
        %v498 = vpack.c.b16 %v490, %v489
        %507 = vmatpush.bf16.msra.mxu0 %v498
        %508 = vmatpush.bf16.msra.mxu0 %v497
        %509 = vmatpush.bf16.msra.mxu0 %v496
        %510 = vmatpush.bf16.msra.mxu0 %v495
        %511 = vmatpush.bf16.msra.mxu0 %v494
        %512 = vmatpush.bf16.msra.mxu0 %v493
        %513 = vmatpush.bf16.msra.mxu0 %v492
        %514 = vmatpush.bf16.msra.mxu0 %v491
        %515 = vmatmul.bf16.gmra.mxu0 %v441
        %v516 = vpop.f32.mrf.mxu0
        %v517 = vadd.f32 0.0, %v516
        %v518 = vpop.f32.mrf.mxu0
        %v519 = vadd.f32 0.0, %v518
        %520 = vmatmul.bf16.gmra.mxu0 %v442
        %v521 = vpop.f32.mrf.mxu0
        %v522 = vadd.f32 0.0, %v521
        %v523 = vpop.f32.mrf.mxu0
        %v524 = vadd.f32 0.0, %v523
        %525 = vdwg.mxu0
        %v526 = vadd.f32 %v428, %v517
        %v527 = vadd.f32 %v429, %v519
        %v528 = vadd.f32 %v430, %v522
        %v529 = vadd.f32 %v431, %v524
        %vm530 = vcmask 261120
        %531 = vst.msk [vmem:[#allocation2] sm:$0xff] %vm530, %v526
        %532 = vst.msk [vmem:[#allocation2 + $0x8] sm:$0xff] %vm530, %v527
        %533 = vst.msk [vmem:[#allocation2 + $0x10] sm:$0xff] %vm530, %v528
        %534 = vst.msk [vmem:[#allocation2 + $0x18] sm:$0xff] %vm530, %v529
        // Predicated region
        $region61: #{tpu_custom_call.1} parent=55 // pred_check
          %p535 = pneg %p419
        $region62: #{tpu_custom_call.1} parent=55 // pred_check_branch
          %537 = sbr.rel (%p535) target = $region64
        $region63: #{tpu_custom_call.1} parent=55 // pred_region
          %v538 = vld [vmem:[#allocation2] sm:$0xff]
          %v539 = vld [vmem:[#allocation2 + $0x8] sm:$0xff]
          %v540 = vld [vmem:[#allocation2 + $0x10] sm:$0xff]
          %v541 = vld [vmem:[#allocation2 + $0x18] sm:$0xff]
          %v542 = vld [vmem:[%s409] sm:$0xff]
          %v543 = vld [vmem:[%s409 + $0x8] sm:$0xff]
          %v544 = vld [vmem:[%s409 + $0x10] sm:$0xff]
          %v545 = vld [vmem:[%s409 + $0x18] sm:$0xff]
          %v546 = vmul.f32 %v538, %v542
          %v547 = vmul.f32 %v539, %v543
          %v548 = vmul.f32 %v540, %v544
          %v549 = vmul.f32 %v541, %v545
          %v550 = vpack.c.bf16 %v547, %v546
          %v551 = vpack.c.bf16 %v549, %v548
          %v552 = vld [vmem:[%s4] sm:$0xf]
          %v553 = vld [vmem:[%s4 + $0x4] sm:$0xf]
          %v554 = vld [vmem:[%s4 + $0x8] sm:$0xf]
          %v555 = vld [vmem:[%s4 + $0xc] sm:$0xf]
          %v556 = vld [vmem:[%s415] sm:$0xf]
          %v557 = vld [vmem:[%s415 + $0x4] sm:$0xf]
          %v558 = vld [vmem:[%s415 + $0x8] sm:$0xf]
          %v559 = vld [vmem:[%s415 + $0xc] sm:$0xf]
          %v560 = vld [vmem:[%s5] sm:$0xf]
          %v561 = vld [vmem:[%s5 + $0x4] sm:$0xf]
          %v562 = vld [vmem:[%s5 + $0x8] sm:$0xf]
          %v563 = vld [vmem:[%s5 + $0xc] sm:$0xf]
          %v568 = vunpack.c.l.b16 %v556
          %v569 = vunpack.c.l.b16 %v557
          %v570 = vunpack.c.l.b16 %v558
          %v571 = vunpack.c.l.b16 %v559
          %v572 = vpack.c.b16 %v569, %v568
          %v573 = vpack.c.b16 %v571, %v570
          %v578 = vunpack.c.l.b16 %v560
          %v579 = vunpack.c.l.b16 %v561
          %v580 = vunpack.c.l.b16 %v562
          %v581 = vunpack.c.l.b16 %v563
          %v582 = vpack.c.b16 %v579, %v578
          %v583 = vpack.c.b16 %v581, %v580
          %v587 = vsel %vm530, %v572, 0
          %v590 = vsel %vm530, %v573, 0
          %592 = vmatpush.bf16.msra.mxu0 0
          %593 = vmatpush.bf16.msra.mxu0 0
          %594 = vmatpush.bf16.msra.mxu0 0
          %595 = vmatpush.bf16.msra.mxu0 0
          %596 = vmatpush.bf16.msra.mxu0 0
          %597 = vmatpush.bf16.msra.mxu0 0
          %598 = vmatpush.bf16.msra.mxu0 %v583
          %599 = vmatpush.bf16.msra.mxu0 %v582
          %600 = vmatmul.bf16.gmra.mxu0 %v587
          %v601 = vpop.f32.mrf.mxu0
          %v602 = vadd.f32 0.0, %v601
          %v603 = vpop.f32.mrf.mxu0
          %v604 = vadd.f32 0.0, %v603
          %605 = vmatmul.bf16.gmra.mxu0 %v590
          %v606 = vpop.f32.mrf.mxu0
          %v607 = vadd.f32 0.0, %v606
          %v608 = vpop.f32.mrf.mxu0
          %v609 = vadd.f32 0.0, %v608
          %610 = vdwg.mxu0
          %v615 = vunpack.c.l.b16 %v552
          %v616 = vunpack.c.l.b16 %v553
          %v617 = vunpack.c.l.b16 %v554
          %v618 = vunpack.c.l.b16 %v555
          %v619 = vpack.c.b16 %v616, %v615
          %v620 = vpack.c.b16 %v618, %v617
          %v624 = vsel %vm530, %v550, 0
          %v627 = vsel %vm530, %v551, 0
          %629 = vmatpush.bf16.msra.mxu0 0
          %630 = vmatpush.bf16.msra.mxu0 0
          %631 = vmatpush.bf16.msra.mxu0 0
          %632 = vmatpush.bf16.msra.mxu0 0
          %633 = vmatpush.bf16.msra.mxu0 0
          %634 = vmatpush.bf16.msra.mxu0 0
          %635 = vmatpush.bf16.msra.mxu0 %v620
          %636 = vmatpush.bf16.msra.mxu0 %v619
          %637 = vmatmul.bf16.gmra.mxu0 %v624
          %v638 = vpop.f32.mrf.mxu0
          %v639 = vadd.f32 %v602, %v638
          %v640 = vpop.f32.mrf.mxu0
          %v641 = vadd.f32 %v604, %v640
          %642 = vmatmul.bf16.gmra.mxu0 %v627
          %v643 = vpop.f32.mrf.mxu0
          %v644 = vadd.f32 %v607, %v643
          %v645 = vpop.f32.mrf.mxu0
          %v646 = vadd.f32 %v609, %v645
          %647 = vdwg.mxu0
          %v648 = vld [vmem:[%s6] sm:$0x1]
          %v650 = vperm.slane %v648, 0
          %v652 = vadd.f32 %v639, %v650
          %v653 = vadd.f32 %v641, %v650
          %v654 = vadd.f32 %v644, %v650
          %v655 = vadd.f32 %v646, %v650
          %vm656 = vcmp.gt.f32.partialorder %v652, 0.0
          %vm657 = vcmp.gt.f32.partialorder %v653, 0.0
          %vm658 = vcmp.gt.f32.partialorder %v654, 0.0
          %vm659 = vcmp.gt.f32.partialorder %v655, 0.0
          %v660 = vmul.f32 %v652, 0.01
          %v661 = vmul.f32 %v653, 0.01
          %v662 = vmul.f32 %v654, 0.01
          %v663 = vmul.f32 %v655, 0.01
          %v664 = vsel %vm656, %v652, %v660
          %v665 = vsel %vm657, %v653, %v661
          %v666 = vsel %vm658, %v654, %v662
          %v667 = vsel %vm659, %v655, %v663
          %v668 = vpack.c.bf16 %v665, %v664
          %v669 = vpack.c.bf16 %v667, %v666
          %v670 = vld [vmem:[%s7] sm:$0xf]
          %v671 = vld [vmem:[%s7 + $0x4] sm:$0xf]
          %v672 = vld [vmem:[%s7 + $0x8] sm:$0xf]
          %v673 = vld [vmem:[%s7 + $0xc] sm:$0xf]
          %v674 = vld [vmem:[%s7 + $0x10] sm:$0xf]
          %v675 = vld [vmem:[%s7 + $0x14] sm:$0xf]
          %v676 = vld [vmem:[%s7 + $0x18] sm:$0xf]
          %v677 = vld [vmem:[%s7 + $0x1c] sm:$0xf]
          %v678 = vld [vmem:[%s8] sm:$0x1]
          %v680 = vperm.slane %v678, 0
          %v690 = vunpack.c.l.b16 %v670
          %v691 = vunpack.c.l.b16 %v671
          %v692 = vunpack.c.l.b16 %v672
          %v693 = vunpack.c.l.b16 %v673
          %v694 = vunpack.c.l.b16 %v674
          %v695 = vunpack.c.l.b16 %v675
          %v696 = vunpack.c.l.b16 %v676
          %v697 = vunpack.c.l.b16 %v677
          %v698 = vpack.c.b16 %v691, %v690
          %v699 = vpack.c.b16 %v693, %v692
          %v700 = vpack.c.b16 %v695, %v694
          %v701 = vpack.c.b16 %v697, %v696
          %vm706 = vcmask 523264
          %v708 = vsel %vm706, %v668, 0
          %v711 = vsel %vm706, %v669, 0
          %713 = vmatpush.bf16.msra.mxu0 0
          %714 = vmatpush.bf16.msra.mxu0 0
          %715 = vmatpush.bf16.msra.mxu0 0
          %716 = vmatpush.bf16.msra.mxu0 0
          %717 = vmatpush.bf16.msra.mxu0 %v701
          %718 = vmatpush.bf16.msra.mxu0 %v700
          %719 = vmatpush.bf16.msra.mxu0 %v699
          %720 = vmatpush.bf16.msra.mxu0 %v698
          %721 = vmatmul.bf16.gmra.mxu0 %v708
          %v722 = vpop.f32.mrf.mxu0
          %v723 = vadd.f32 %v680, %v722
          %v724 = vpop.f32.mrf.mxu0
          %v725 = vadd.f32 %v680, %v724
          %726 = vmatmul.bf16.gmra.mxu0 %v711
          %v727 = vpop.f32.mrf.mxu0
          %v728 = vadd.f32 %v680, %v727
          %v729 = vpop.f32.mrf.mxu0
          %v730 = vadd.f32 %v680, %v729
          %731 = vdwg.mxu0
          %v732 = vpack.c.bf16 %v723, %v723
          %v733 = vpack.c.bf16 %v725, %v725
          %v734 = vpack.c.bf16 %v728, %v728
          %v735 = vpack.c.bf16 %v730, %v730
          %736 = vst [vmem:[%s391] sm:$0xf] %v732
          %737 = vst [vmem:[%s391 + $0x4] sm:$0xf] %v733
          %738 = vst [vmem:[%s391 + $0x8] sm:$0xf] %v734
          %739 = vst [vmem:[%s391 + $0xc] sm:$0xf] %v735
        $region64: #{tpu_custom_call.1} parent=55 // pred_fallthru
          _
        %s740 = sand.u32 %s254, 1
        %s741 = scalar_lea.sflag [#allocation4], %s740
        %s742 = sand.u32 %s254, 1
        %s743 = smul.addr %s742, 16
        %s744 = scalar_lea.vmem [#allocation3], %s743
        // Predicated region
        $region65: #{tpu_custom_call.1} parent=55 // pred_check
          %p745 = pneg %p264
        $region66: #{tpu_custom_call.1} parent=55 // pred_check_branch
          %747 = sbr.rel (%p745) target = $region68
        $region67: #{tpu_custom_call.1} parent=55 // pred_region
          %s748 = smul.u32 4, %s27
          %750 = vsyncadd %s741, 0
          %s751 = smul.addr %s748, 4
          %s752 = scalar_lea.hbm %s9, %s751
          %s753 = sshll.u32 %s744, 4
          %s754 = int_to_ptr.vmem [resolvable:$true] %s753
          %s755 = sshll.u32 %s752, 4
          %s756 = int_to_ptr.hbm [resolvable:$true] %s755
          %761 = dma.vmem_to_hbm [thread:$0]  %s754, 256, %s756, %s741, 64, 64, 4
        $region68: #{tpu_custom_call.1} parent=55 // pred_fallthru
          _
      $region56: #{tpu_custom_call.1} parent=5 // pred_fallthru
        _
      %p762 = scmp.le.s32.totalorder 2, %s18
      // Predicated region
      $region69: #{tpu_custom_call.1} parent=5 // pred_check
        %p763 = pneg %p762
      $region70: #{tpu_custom_call.1} parent=5 // pred_check_branch
        %765 = sbr.rel (%p763) target = $region72
      $region71: #{tpu_custom_call.1} parent=5 // pred_region
        %s766 = ssub.s32 %s18, 2
        // Predicated region
        $region73: #{tpu_custom_call.1} parent=71 // pred_check
          %p767 = pneg %p270
        $region74: #{tpu_custom_call.1} parent=71 // pred_check_branch
          %769 = sbr.rel (%p767) target = $region76
        $region75: #{tpu_custom_call.1} parent=71 // pred_region
          %s770 = sand.u32 %s255, 1
          %s771 = scalar_lea.sflag [#allocation4], %s770
          %s772 = sand.u32 %s255, 1
          %s773 = smul.addr %s772, 16
          %s774 = scalar_lea.vmem [#allocation3], %s773
          %776 = dma.done %s771, 256
        $region76: #{tpu_custom_call.1} parent=71 // pred_fallthru
          _
      $region72: #{tpu_custom_call.1} parent=5 // pred_fallthru
        _
    $region6: #{tpu_custom_call.1} parent=1 // loop_footer
      %s22 = sadd.s32 1, %s18
    $region7: #{tpu_custom_call.1} parent=1 // loop_footer_branch
      %17 = sbr.rel target = $region3
    $region8: #{tpu_custom_call.1} parent=1 // loop_exit
      _
    %777 = vsyncpa [#allocation4], 1
    %s778 = scalar_lea.sflag [#allocation4], 1
    %779 = vsyncpa %s778, 1

</llo_original>
